<compile_context>
chip_gen: v7x
topology: tpu7x:2x2x1
jax: 0.10.0
libtpu: 0.0.40
codegen_flags: <defaults>
</compile_context>

<pallas_src>
import math
import jax
import jax.numpy as jnp
from jax.experimental import pallas as pl
from jax.experimental.pallas import tpu as pltpu


# ----------------------------- Pallas kernel --------------------------------
def _osg_decoder_kernel(feat_ref, w1_ref, b1_ref, w2_ref, b2_ref, out_ref):
    # feat_ref: (P, tm, C) feature tile of one batch element.
    # Plane mean: the 1/P factor is folded into w1 by the wrapper -> plain sum.
    x = jnp.sum(feat_ref[...], axis=0)                                  # (tm, C)

    # FC1, transposed form: h^T = W1 @ x^T (contract the C dim of both).
    h = jax.lax.dot_general(
        w1_ref[...], x,
        dimension_numbers=(((1,), (1,)), ((), ())),
        preferred_element_type=jnp.float32)                             # (H, tm)
    h = h + b1_ref[...]                                                 # (H,1) bcast
    # Softplus (numerically stable): max(x, 0) + log1p(exp(-|x|)).
    h = jnp.maximum(h, 0.0) + jnp.log1p(jnp.exp(-jnp.abs(h)))

    # FC2, transposed form: y^T = W2 @ h^T.
    y = jnp.dot(w2_ref[...], h, preferred_element_type=jnp.float32)     # (O, tm)
    y = y + b2_ref[...]                                                 # (O,1) bcast

    # Fused, lane-dense output: sublane 0 = raw sigma, sublanes 1.. = rgb.
    squashed = jax.nn.sigmoid(y) * (1.0 + 2.0 * 0.001) - 0.001
    row = jax.lax.broadcasted_iota(jnp.int32, y.shape, dimension=0)
    out_ref[...] = jnp.where(row == 0, y, squashed)


# ------------------------------ wrapper --------------------------------------
def _pick_row_tile(M, N, tm_cap):
    """Largest lane-aligned row tile <= tm_cap; keeps both v7x TCs busy."""
    tm = int(min(tm_cap, M))
    if tm == M:
        # Single block spans M.  If the batch is 1, split so the 2-TC v7x
        # megacore still gets >= 2 grid programs.
        if N == 1 and M >= 256:
            tm = pl.cdiv(pl.cdiv(M, 2), 128) * 128
        return tm
    # Ragged last block is fine (rows are independent, OOB writes masked);
    # keep tm a multiple of 128 so the lane-dense output block stays aligned.
    return max(128, (tm // 128) * 128)


def osg_decoder_forward(sampled_features, ray_directions, params, *, tm=2048):
    """sampled_features: (N, P, M, C) float32; ray_directions unused (matches PyTorch)."""
    del ray_directions  # not used by OSGDecoder.forward
    N, P, M, C = sampled_features.shape

    lr_mul = params["lr_mul"]
    # FullyConnectedLayer: y = x @ (W * lr_mul/sqrt(in)).T + b * lr_mul.
    # Keep W in its native (out, in) layout (the kernel contracts the `in`
    # dim of both operands) and fold the 1/P of the plane mean into W1 only.
    w1 = params["w1"] * (lr_mul / math.sqrt(C)) / float(P)     # (H, C)
    b1 = (params["b1"] * lr_mul)[:, None]                      # (H, 1)
    H = w1.shape[0]
    w2 = params["w2"] * (lr_mul / math.sqrt(H))                # (O, H)
    b2 = (params["b2"] * lr_mul)[:, None]                      # (O, 1)
    O = w2.shape[0]

    tm = _pick_row_tile(M, N, tm)
    grid = (N, pl.cdiv(M, tm))

    # Explicit scoped-VMEM budget (double-buffered, lane-padded feature tile
    # dominates); keeps larger tm compiling on v5e's 16 MiB default.
    feat_tile_bytes = P * tm * max(C, 128) * 4
    vmem_limit = int(min(56 << 20, max(32 << 20, 4 * feat_tile_bytes)))

    # TODO(synk): a bf16 feature path (f32 accumulation) would halve the
    # dominant HBM read; kept f32 to preserve the module's exact forward
    # numerics and the 1e-5 tolerance below.
    out = pl.pallas_call(
        _osg_decoder_kernel,
        out_shape=jax.ShapeDtypeStruct((N, O, M), jnp.float32),
        grid_spec=pltpu.PrefetchScalarGridSpec(
            num_scalar_prefetch=0,
            grid=grid,
            in_specs=[
                # Read straight from (N, P, M, C); kernel sees (P, tm, C).
                pl.BlockSpec((pl.Squeezed(), P, tm, C),
                             lambda n, i: (n, 0, i, 0)),
                pl.BlockSpec((H, C), lambda n, i: (0, 0)),   # W1 (resident)
                pl.BlockSpec((H, 1), lambda n, i: (0, 0)),   # b1
                pl.BlockSpec((O, H), lambda n, i: (0, 0)),   # W2 (resident)
                pl.BlockSpec((O, 1), lambda n, i: (0, 0)),   # b2
            ],
            # Lane-dense output: minor axis is the row tile, not O=4.
            out_specs=pl.BlockSpec((pl.Squeezed(), O, tm),
                                   lambda n, i: (n, 0, i)),
        ),
        compiler_params=pltpu.CompilerParams(
            dimension_semantics=("parallel", "parallel"),
            vmem_limit_bytes=vmem_limit),
    )(sampled_features, w1, b1, w2, b2)

    # out: (N, 1+out_dim, M).  Tiny wrapper-side transposes for the API shape.
    rgb = jnp.transpose(out[:, 1:, :], (0, 2, 1))
    sigma = jnp.transpose(out[:, 0:1, :], (0, 2, 1))
    return {"rgb": rgb, "sigma": sigma}


# ---------------------------- pure-JAX reference -----------------------------
def osg_decoder_reference(sampled_features, ray_directions, params):
    del ray_directions
    N, P, M, C = sampled_features.shape
    lr_mul = params["lr_mul"]
    x = sampled_features.mean(axis=1).reshape(N * M, C)
    w1 = params["w1"] * (lr_mul / math.sqrt(C))
    b1 = params["b1"] * lr_mul
    h = jax.nn.softplus(x @ w1.T + b1)
    H = w1.shape[0]
    w2 = params["w2"] * (lr_mul / math.sqrt(H))
    b2 = params["b2"] * lr_mul
    y = (h @ w2.T + b2).reshape(N, M, -1)
    rgb = jax.nn.sigmoid(y[..., 1:]) * (1 + 2 * 0.001) - 0.001
    sigma = y[..., 0:1]
    return {"rgb": rgb, "sigma": sigma}


# --------------------------------- main ---------------------------------------
if __name__ == "__main__":
    # Small shapes consistent with the module:
    #   N (batch) = 2, P (tri-planes) = 3, M (rays*samples) = 64, C (n_features) = 32
    #   hidden_dim = 64 (fixed by module), decoder_output_dim = 3, decoder_lr_mul = 1.0
    N, P, M, C = 2, 3, 64, 32
    HIDDEN = 64
    DECODER_OUTPUT_DIM = 3
    DECODER_LR_MUL = 1.0

    key = jax.random.PRNGKey(0)
    k_feat, k_dirs, k_w1, k_w2 = jax.random.split(key, 4)

    sampled_features = jax.random.normal(k_feat, (N, P, M, C), dtype=jnp.float32)
    ray_directions = jax.random.normal(k_dirs, (N, M, 3), dtype=jnp.float32)

    # Deterministic parameter init (FullyConnectedLayer: weight ~ randn / lr_mul, bias = 0)
    params = {
        "w1": jax.random.normal(k_w1, (HIDDEN, C), dtype=jnp.float32) / DECODER_LR_MUL,
        "b1": jnp.zeros((HIDDEN,), dtype=jnp.float32),
        "w2": jax.random.normal(k_w2, (1 + DECODER_OUTPUT_DIM, HIDDEN),
                                dtype=jnp.float32) / DECODER_LR_MUL,
        "b2": jnp.zeros((1 + DECODER_OUTPUT_DIM,), dtype=jnp.float32),
        "lr_mul": DECODER_LR_MUL,
    }

    out = osg_decoder_forward(sampled_features, ray_directions, params)
    jax.block_until_ready(out)

    ref = osg_decoder_reference(sampled_features, ray_directions, params)
    assert out["rgb"].shape == (N, M, DECODER_OUTPUT_DIM)
    assert out["sigma"].shape == (N, M, 1)
    assert jnp.allclose(out["rgb"], ref["rgb"], atol=1e-5, rtol=1e-5)
    assert jnp.allclose(out["sigma"], ref["sigma"], atol=1e-5, rtol=1e-5)

    print("KERNEL_OK")
</pallas_src>

<mosaic_0001>
module attributes {stable_mosaic.version = 11 : i64} {
  func.func @_osg_decoder_kernel(%arg0: i32, %arg1: i32, %arg2: memref<1x3x64x32xf32, #tpu.memory_space<vmem>>, %arg3: memref<64x32xf32, #tpu.memory_space<vmem>>, %arg4: memref<64x1xf32, #tpu.memory_space<vmem>>, %arg5: memref<4x64xf32, #tpu.memory_space<vmem>>, %arg6: memref<4x1xf32, #tpu.memory_space<vmem>>, %arg7: memref<1x4x64xf32, #tpu.memory_space<vmem>>) attributes {dimension_semantics = [#tpu.dimension_semantics<parallel>, #tpu.dimension_semantics<parallel>], iteration_bounds = array<i64: 2, 1>, scalar_prefetch = 0 : i64, scratch_operands = 0 : i64, tpu.core_type = #tpu.core_type<tc>, window_params = [{transform_indices = @transform_0, window_bounds = array<i64: 1, 3, 64, 32>}, {pipeline_mode = #tpu.pipeline_mode<synchronous>, transform_indices = @transform_1, window_bounds = array<i64: 64, 32>}, {pipeline_mode = #tpu.pipeline_mode<synchronous>, transform_indices = @transform_2, window_bounds = array<i64: 64, 1>}, {pipeline_mode = #tpu.pipeline_mode<synchronous>, transform_indices = @transform_3, window_bounds = array<i64: 4, 64>}, {pipeline_mode = #tpu.pipeline_mode<synchronous>, transform_indices = @transform_4, window_bounds = array<i64: 4, 1>}, {transform_indices = @transform_5, window_bounds = array<i64: 1, 4, 64>}]} {
    %c0 = arith.constant 0 : index
    %c0_0 = arith.constant 0 : index
    %c0_1 = arith.constant 0 : index
    %c0_2 = arith.constant 0 : index
    %0 = vector.load %arg2[%c0, %c0_0, %c0_1, %c0_2] : memref<1x3x64x32xf32, #tpu.memory_space<vmem>>, vector<1x3x64x32xf32>
    %1 = vector.shape_cast %0 : vector<1x3x64x32xf32> to vector<3x64x32xf32>
    %cst = arith.constant dense<0.000000e+00> : vector<64x32xf32>
    %2 = vector.multi_reduction <add>, %1, %cst [0] : vector<3x64x32xf32> to vector<64x32xf32>
    %c0_3 = arith.constant 0 : index
    %c0_4 = arith.constant 0 : index
    %3 = vector.load %arg3[%c0_3, %c0_4] : memref<64x32xf32, #tpu.memory_space<vmem>>, vector<64x32xf32>
    %cst_5 = arith.constant dense<0.000000e+00> : vector<64x64xf32>
    %4 = tpu.matmul %3, %2, %cst_5 {dimension_numbers = #tpu.dot_dimension_numbers<[1], [1], [0], [0], [0, 0, 1, 0], [], []>} : vector<64x32xf32>, vector<64x32xf32>, vector<64x64xf32> -> vector<64x64xf32>
    %c0_6 = arith.constant 0 : index
    %c0_7 = arith.constant 0 : index
    %5 = vector.load %arg4[%c0_6, %c0_7] : memref<64x1xf32, #tpu.memory_space<vmem>>, vector<64x1xf32>
    %6 = vector.broadcast %5 : vector<64x1xf32> to vector<64x64xf32>
    %7 = arith.addf %4, %6 : vector<64x64xf32>
    %cst_8 = arith.constant 0.000000e+00 : f32
    %8 = vector.broadcast %cst_8 : f32 to vector<64x64xf32>
    %9 = arith.maximumf %7, %8 : vector<64x64xf32>
    %10 = math.absf %7 : vector<64x64xf32>
    %cst_9 = arith.constant 0.000000e+00 : f32
    %11 = vector.broadcast %cst_9 : f32 to vector<64x64xf32>
    %12 = arith.subf %11, %10 : vector<64x64xf32>
    %13 = math.exp %12 : vector<64x64xf32>
    %14 = math.log1p %13 : vector<64x64xf32>
    %15 = arith.addf %9, %14 : vector<64x64xf32>
    %c0_10 = arith.constant 0 : index
    %c0_11 = arith.constant 0 : index
    %16 = vector.load %arg5[%c0_10, %c0_11] : memref<4x64xf32, #tpu.memory_space<vmem>>, vector<4x64xf32>
    %cst_12 = arith.constant dense<0.000000e+00> : vector<4x64xf32>
    %17 = tpu.matmul %16, %15, %cst_12 {dimension_numbers = #tpu.dot_dimension_numbers<[1], [0], [0], [1], [0, 0, 1, 1], [], []>} : vector<4x64xf32>, vector<64x64xf32>, vector<4x64xf32> -> vector<4x64xf32>
    %c0_13 = arith.constant 0 : index
    %c0_14 = arith.constant 0 : index
    %18 = vector.load %arg6[%c0_13, %c0_14] : memref<4x1xf32, #tpu.memory_space<vmem>>, vector<4x1xf32>
    %19 = vector.broadcast %18 : vector<4x1xf32> to vector<4x64xf32>
    %20 = arith.addf %17, %19 : vector<4x64xf32>
    %21 = arith.negf %20 : vector<4x64xf32>
    %22 = math.exp %21 : vector<4x64xf32>
    %cst_15 = arith.constant 1.000000e+00 : f32
    %23 = vector.broadcast %cst_15 : f32 to vector<4x64xf32>
    %24 = arith.addf %23, %22 : vector<4x64xf32>
    %25 = arith.divf %23, %24 : vector<4x64xf32>
    %cst_16 = arith.constant 1.002000e+00 : f32
    %26 = vector.broadcast %cst_16 : f32 to vector<4x64xf32>
    %27 = arith.mulf %25, %26 : vector<4x64xf32>
    %cst_17 = arith.constant 1.000000e-03 : f32
    %28 = vector.broadcast %cst_17 : f32 to vector<4x64xf32>
    %29 = arith.subf %27, %28 : vector<4x64xf32>
    %30 = tpu.iota {dimensions = array<i32: 0>} : vector<4x64xi32>
    %c0_i32 = arith.constant 0 : i32
    %31 = vector.broadcast %c0_i32 : i32 to vector<4x64xi32>
    %32 = arith.cmpi eq, %30, %31 : vector<4x64xi32>
    %33 = arith.select %32, %20, %29 : vector<4x64xi1>, vector<4x64xf32>
    %c0_18 = arith.constant 0 : index
    %c0_19 = arith.constant 0 : index
    %c0_20 = arith.constant 0 : index
    %34 = vector.load %arg7[%c0_18, %c0_19, %c0_20] : memref<1x4x64xf32, #tpu.memory_space<vmem>>, vector<1x4x64xf32>
    %35 = vector.shape_cast %34 : vector<1x4x64xf32> to vector<4x64xf32>
    %36 = vector.shape_cast %33 : vector<4x64xf32> to vector<1x4x64xf32>
    tpu.vector_store %arg7[%c0_18, %c0_19, %c0_20], %36 {strides = array<i32>} : memref<1x4x64xf32, #tpu.memory_space<vmem>>, vector<1x4x64xf32>,
    return
  }
  func.func @transform_0(%arg0: i32, %arg1: i32) -> (i32, i32, i32, i32) {
    %c0_i32 = arith.constant 0 : i32
    %c0_i32_0 = arith.constant 0 : i32
    %c0_i32_1 = arith.constant 0 : i32
    return %arg0, %c0_i32, %arg1, %c0_i32_0 : i32, i32, i32, i32
  }
  func.func @transform_1(%arg0: i32, %arg1: i32) -> (i32, i32) {
    %c0_i32 = arith.constant 0 : i32
    %c0_i32_0 = arith.constant 0 : i32
    %c0_i32_1 = arith.constant 0 : i32
    return %c0_i32, %c0_i32_0 : i32, i32
  }
  func.func @transform_2(%arg0: i32, %arg1: i32) -> (i32, i32) {
    %c0_i32 = arith.constant 0 : i32
    %c0_i32_0 = arith.constant 0 : i32
    %c0_i32_1 = arith.constant 0 : i32
    return %c0_i32, %c0_i32_0 : i32, i32
  }
  func.func @transform_3(%arg0: i32, %arg1: i32) -> (i32, i32) {
    %c0_i32 = arith.constant 0 : i32
    %c0_i32_0 = arith.constant 0 : i32
    %c0_i32_1 = arith.constant 0 : i32
    return %c0_i32, %c0_i32_0 : i32, i32
  }
  func.func @transform_4(%arg0: i32, %arg1: i32) -> (i32, i32) {
    %c0_i32 = arith.constant 0 : i32
    %c0_i32_0 = arith.constant 0 : i32
    %c0_i32_1 = arith.constant 0 : i32
    return %c0_i32, %c0_i32_0 : i32, i32
  }
  func.func @transform_5(%arg0: i32, %arg1: i32) -> (i32, i32, i32) {
    %c0_i32 = arith.constant 0 : i32
    %c0_i32_0 = arith.constant 0 : i32
    return %arg0, %c0_i32, %arg1 : i32, i32, i32
  }
}

</mosaic_0001>

<llo_original>
// kernel: tpu_custom_call.1
$region0: #{tpu_custom_call.1}
  #allocation0 [shape = 'u32[]', space=smem, size = 0x4, offset = 0x4, fixed_abs, tag = 'smem constant byte address 0x4 - core index']
  #allocation1 [shape = 'u32[144,128]{1,0:T(1,128)}', space=vmem, size = 0x12000, scoped, tag = 'internal scratch']
  %s0 = inlined_call_operand.vmem [shape: f32[2,3,64,32], index: 0, kind: input, shape index: {}]
  %s1 = inlined_call_operand.vmem [shape: f32[64,32], index: 1, kind: input, shape index: {}]
  %s2 = inlined_call_operand.vmem [shape: f32[64,1], index: 2, kind: input, shape index: {}]
  %s3 = inlined_call_operand.vmem [shape: f32[4,64], index: 3, kind: input, shape index: {}]
  %s4 = inlined_call_operand.vmem [shape: f32[4,1], index: 4, kind: input, shape index: {}]
  %s5 = inlined_call_operand.hbm [shape: f32[2,4,64], index: 5, kind: output, shape index: {}]
  %s6 = sld [smem:[#allocation0]]
  $region53: #{tpu_custom_call.1} parent=0
    _
  %s8 = ssub.s32 1, %s6
  %s9 = scalar_select 0, %s8, %s6
  $region1: #{tpu_custom_call.1} parent=0
    #allocation2 [shape = 'u8[4096]{0}', space=vmem, size = 0x1000, scoped, tag = 'output window, operand 0']
    #allocation3 [shape = 's32[2]{0}', space=sflag, size = 0x8, scoped, tag = 'scoped memory for tpu_custom_call.1']
    %10 = vsyncpa [#allocation3], 0
    %s11 = scalar_lea.sflag [#allocation3], 1
    %12 = vsyncpa %s11, 0
    loop: start=0, step=1, limit=4
    $region2: #{tpu_custom_call.1} parent=1 // loop_pre_header
      _
    $region3: #{tpu_custom_call.1} parent=1 // loop_header
      %s14 = sphi 0, %s18
      %p15 = scmp.ge.s32.totalorder %s14, 4
      %s21 = sphi 0, %s33
      %s22 = sphi 0, %s29
      %s23 = sphi 0, %s21
      %s24 = sphi 0, %s22
      %s25 = sphi 0, %s23
      %s26 = sphi 0, %s24
      %s38 = sphi 0, %s40
      %s41 = sphi 0, %s38
      %s42 = sphi 0, %s41
      %s58 = sphi 0, %s42
      %s62 = sphi 0, %s62
      %s64 = sphi 0, %s62
      %s65 = sphi 0, %s64
      %s79 = sphi 0, %s65
      %s83 = sphi 0, %s83
      %s85 = sphi 0, %s83
      %s86 = sphi 0, %s85
      %s100 = sphi 0, %s86
      %s104 = sphi 0, %s104
      %s106 = sphi 0, %s104
      %s107 = sphi 0, %s106
      %s121 = sphi 0, %s107
      %s125 = sphi 0, %s125
      %s127 = sphi 0, %s125
      %s128 = sphi 0, %s127
      %s142 = sphi 0, %s128
      %s150 = sphi 0, %s152
      %s153 = sphi 0, %s150
      %s154 = sphi 0, %s153
      %s170 = sphi 0, %s154
    $region4: #{tpu_custom_call.1} parent=1 // loop_header_branch
      %17 = sbr.rel (%p15) target = $region8
    $region5: #{tpu_custom_call.1} parent=1 // loop_body
      %s19 = ssub.s32 %s14, 1
      %s20 = ssub.s32 %s14, 2
      %s27 = sadd.s32 1, %s22
      %p28 = scmp.ge.s32.totalorder %s27, 1
      %s29 = scalar_select %p28, 0, %s27
      %s30 = sadd.s32 1, %s21
      %s31 = scalar_select %p28, %s30, %s21
      %p32 = scmp.ge.s32.totalorder %s31, 2
      %s33 = scalar_select %p32, 0, %s31
      %s34 = ssub.s32 %s21, %s33
      %s35 = ssub.s32 %s22, %s29
      %s36 = sor.u32 %s34, %s35
      %p37 = scmp.eq.s32.totalorder %s36, 0
      %s39 = sadd.s32 %s38, 1
      %s40 = scalar_select %p37, %s38, %s39
      %p43 = pneg %p37
      %p44 = scmp.eq.s32.totalorder %s14, 1
      %p45 = por %p43, %p44
      %p46 = scmp.ne.s32.totalorder %s38, %s41
      %p47 = scmp.eq.s32.totalorder %s14, 0
      %p48 = por %p46, %p47
      %p49 = scmp.ne.s32.totalorder %s38, %s41
      %p50 = scmp.eq.s32.totalorder %s19, 1
      %p51 = por %p49, %p50
      %p52 = scmp.ne.s32.totalorder %s41, %s42
      %p53 = scmp.eq.s32.totalorder %s19, 0
      %p54 = por %p52, %p53
      %p55 = scmp.ne.s32.totalorder %s41, %s42
      %p56 = scmp.eq.s32.totalorder %s20, 1
      %p57 = por %p55, %p56
      %p59 = scmp.ne.s32.totalorder %s42, %s58
      %p60 = scmp.eq.s32.totalorder %s20, 0
      %p61 = por %p59, %p60
      %s63 = sadd.s32 %s62, 1
      %p66 = scmp.eq.s32.totalorder %s14, 1
      %p67 = scmp.ne.s32.totalorder %s62, %s64
      %p68 = scmp.eq.s32.totalorder %s14, 0
      %p69 = por %p67, %p68
      %p70 = scmp.ne.s32.totalorder %s62, %s64
      %p71 = scmp.eq.s32.totalorder %s19, 1
      %p72 = por %p70, %p71
      %p73 = scmp.ne.s32.totalorder %s64, %s65
      %p74 = scmp.eq.s32.totalorder %s19, 0
      %p75 = por %p73, %p74
      %p76 = scmp.ne.s32.totalorder %s64, %s65
      %p77 = scmp.eq.s32.totalorder %s20, 1
      %p78 = por %p76, %p77
      %p80 = scmp.ne.s32.totalorder %s65, %s79
      %p81 = scmp.eq.s32.totalorder %s20, 0
      %p82 = por %p80, %p81
      %s84 = sadd.s32 %s83, 1
      %p87 = scmp.eq.s32.totalorder %s14, 1
      %p88 = scmp.ne.s32.totalorder %s83, %s85
      %p89 = scmp.eq.s32.totalorder %s14, 0
      %p90 = por %p88, %p89
      %p91 = scmp.ne.s32.totalorder %s83, %s85
      %p92 = scmp.eq.s32.totalorder %s19, 1
      %p93 = por %p91, %p92
      %p94 = scmp.ne.s32.totalorder %s85, %s86
      %p95 = scmp.eq.s32.totalorder %s19, 0
      %p96 = por %p94, %p95
      %p97 = scmp.ne.s32.totalorder %s85, %s86
      %p98 = scmp.eq.s32.totalorder %s20, 1
      %p99 = por %p97, %p98
      %p101 = scmp.ne.s32.totalorder %s86, %s100
      %p102 = scmp.eq.s32.totalorder %s20, 0
      %p103 = por %p101, %p102
      %s105 = sadd.s32 %s104, 1
      %p108 = scmp.eq.s32.totalorder %s14, 1
      %p109 = scmp.ne.s32.totalorder %s104, %s106
      %p110 = scmp.eq.s32.totalorder %s14, 0
      %p111 = por %p109, %p110
      %p112 = scmp.ne.s32.totalorder %s104, %s106
      %p113 = scmp.eq.s32.totalorder %s19, 1
      %p114 = por %p112, %p113
      %p115 = scmp.ne.s32.totalorder %s106, %s107
      %p116 = scmp.eq.s32.totalorder %s19, 0
      %p117 = por %p115, %p116
      %p118 = scmp.ne.s32.totalorder %s106, %s107
      %p119 = scmp.eq.s32.totalorder %s20, 1
      %p120 = por %p118, %p119
      %p122 = scmp.ne.s32.totalorder %s107, %s121
      %p123 = scmp.eq.s32.totalorder %s20, 0
      %p124 = por %p122, %p123
      %s126 = sadd.s32 %s125, 1
      %p129 = scmp.eq.s32.totalorder %s14, 1
      %p130 = scmp.ne.s32.totalorder %s125, %s127
      %p131 = scmp.eq.s32.totalorder %s14, 0
      %p132 = por %p130, %p131
      %p133 = scmp.ne.s32.totalorder %s125, %s127
      %p134 = scmp.eq.s32.totalorder %s19, 1
      %p135 = por %p133, %p134
      %p136 = scmp.ne.s32.totalorder %s127, %s128
      %p137 = scmp.eq.s32.totalorder %s19, 0
      %p138 = por %p136, %p137
      %p139 = scmp.ne.s32.totalorder %s127, %s128
      %p140 = scmp.eq.s32.totalorder %s20, 1
      %p141 = por %p139, %p140
      %p143 = scmp.ne.s32.totalorder %s128, %s142
      %p144 = scmp.eq.s32.totalorder %s20, 0
      %p145 = por %p143, %p144
      %s146 = ssub.s32 %s21, %s33
      %s147 = ssub.s32 %s22, %s29
      %s148 = sor.u32 %s146, %s147
      %p149 = scmp.eq.s32.totalorder %s148, 0
      %s151 = sadd.s32 %s150, 1
      %s152 = scalar_select %p149, %s150, %s151
      %p155 = pneg %p149
      %p156 = scmp.eq.s32.totalorder %s14, 1
      %p157 = por %p155, %p156
      %p158 = scmp.ne.s32.totalorder %s150, %s153
      %p159 = scmp.eq.s32.totalorder %s14, 0
      %p160 = por %p158, %p159
      %p161 = scmp.ne.s32.totalorder %s150, %s153
      %p162 = scmp.eq.s32.totalorder %s19, 1
      %p163 = por %p161, %p162
      %p164 = scmp.ne.s32.totalorder %s153, %s154
      %p165 = scmp.eq.s32.totalorder %s19, 0
      %p166 = por %p164, %p165
      %p167 = scmp.ne.s32.totalorder %s153, %s154
      %p168 = scmp.eq.s32.totalorder %s20, 1
      %p169 = por %p167, %p168
      %p171 = scmp.ne.s32.totalorder %s154, %s170
      %p172 = scmp.eq.s32.totalorder %s20, 0
      %p173 = por %p171, %p172
      %p174 = scmp.le.s32.totalorder 1, %s14
      %p175 = scmp.lt.s32.totalorder %s14, 3
      %p176 = pnand %p174, %p175
      %p177 = pneg %p176
      // Predicated region
      $region9: #{tpu_custom_call.1} parent=5 // pred_check
        _
      $region10: #{tpu_custom_call.1} parent=5 // pred_check_branch
        %179 = sbr.rel (%p176) target = $region12
      $region11: #{tpu_custom_call.1} parent=5 // pred_region
        %s180 = ssub.s32 %s14, 1
        // Predicated region
        $region13: #{tpu_custom_call.1} parent=11 // pred_check
          %p181 = pneg %p75
        $region14: #{tpu_custom_call.1} parent=11 // pred_check_branch
          %183 = sbr.rel (%p181) target = $region16
        $region15: #{tpu_custom_call.1} parent=11 // pred_region
          _
        $region16: #{tpu_custom_call.1} parent=11 // pred_fallthru
          _
        // Predicated region
        $region17: #{tpu_custom_call.1} parent=11 // pred_check
          %p184 = pneg %p96
        $region18: #{tpu_custom_call.1} parent=11 // pred_check_branch
          %186 = sbr.rel (%p184) target = $region20
        $region19: #{tpu_custom_call.1} parent=11 // pred_region
          _
        $region20: #{tpu_custom_call.1} parent=11 // pred_fallthru
          _
        // Predicated region
        $region21: #{tpu_custom_call.1} parent=11 // pred_check
          %p187 = pneg %p117
        $region22: #{tpu_custom_call.1} parent=11 // pred_check_branch
          %189 = sbr.rel (%p187) target = $region24
        $region23: #{tpu_custom_call.1} parent=11 // pred_region
          _
        $region24: #{tpu_custom_call.1} parent=11 // pred_fallthru
          _
        // Predicated region
        $region25: #{tpu_custom_call.1} parent=11 // pred_check
          %p190 = pneg %p138
        $region26: #{tpu_custom_call.1} parent=11 // pred_check_branch
          %192 = sbr.rel (%p190) target = $region28
        $region27: #{tpu_custom_call.1} parent=11 // pred_region
          _
        $region28: #{tpu_custom_call.1} parent=11 // pred_fallthru
          _
      $region12: #{tpu_custom_call.1} parent=5 // pred_fallthru
        _
      %p193 = scmp.lt.s32.totalorder %s14, 2
      // Predicated region
      $region29: #{tpu_custom_call.1} parent=5 // pred_check
        %p194 = pneg %p193
      $region30: #{tpu_custom_call.1} parent=5 // pred_check_branch
        %196 = sbr.rel (%p194) target = $region32
      $region31: #{tpu_custom_call.1} parent=5 // pred_region
        // Predicated region
        $region33: #{tpu_custom_call.1} parent=31 // pred_check
          %p197 = pneg %p48
        $region34: #{tpu_custom_call.1} parent=31 // pred_check_branch
          %199 = sbr.rel (%p197) target = $region36
        $region35: #{tpu_custom_call.1} parent=31 // pred_region
          %s200 = smul.u32 8, %s22
          %p201 = scmp.lt.s32.totalorder %s21, 1
          %s202 = scalar_select %p201, %s21, 1
          %p203 = scmp.lt.s32.totalorder %s200, 7
          %s204 = scalar_select %p203, %s200, 7
          %s205 = smul.addr %s202, 24
          %s206 = sadd.s32 %s204, %s205
          %s207 = smul.addr %s206, 8
          %s208 = scalar_lea.vmem %s0, %s207
          %s209 = smul.u32 8, %s22
        $region36: #{tpu_custom_call.1} parent=31 // pred_fallthru
          _
      $region32: #{tpu_custom_call.1} parent=5 // pred_fallthru
        _
      %p210 = scmp.le.s32.totalorder 1, %s14
      %p211 = scmp.lt.s32.totalorder %s14, 3
      %p212 = pnand %p210, %p211
      %p213 = pneg %p212
      // Predicated region
      $region37: #{tpu_custom_call.1} parent=5 // pred_check
        _
      $region38: #{tpu_custom_call.1} parent=5 // pred_check_branch
        %215 = sbr.rel (%p212) target = $region40
      $region39: #{tpu_custom_call.1} parent=5 // pred_region
        %s216 = ssub.s32 %s14, 1
        %s217 = smul.u32 8, %s24
        %p218 = scmp.lt.s32.totalorder %s23, 1
        %s219 = scalar_select %p218, %s23, 1
        %p220 = scmp.lt.s32.totalorder %s217, 7
        %s221 = scalar_select %p220, %s217, 7
        %s222 = smul.addr %s219, 24
        %s223 = sadd.s32 %s221, %s222
        %s224 = smul.addr %s223, 8
        %s225 = scalar_lea.vmem %s0, %s224
        %p226 = pneg %p54
        %p227 = pneg %p51
        %p228 = pneg %p75
        %p229 = pneg %p72
        %p230 = pneg %p96
        %p231 = pneg %p93
        %p232 = pneg %p117
        %p233 = pneg %p114
        %p234 = pneg %p138
        %p235 = pneg %p135
        %p236 = pneg %p166
        %p237 = pneg %p163
        %s238 = sand.u32 %s153, 1
        %s239 = scalar_lea.sflag [#allocation3], %s238
        %s240 = sand.u32 %s153, 1
        %s241 = smul.addr %s240, 4
        %s242 = scalar_lea.vmem [#allocation2], %s241
        %s243 = smul.u32 8, %s24
        %p244 = scmp.lt.s32.totalorder %s23, 1
        %s245 = scalar_select %p244, %s23, 1
        %p246 = scmp.lt.s32.totalorder %s243, 7
        %s247 = scalar_select %p246, %s243, 7
        %s248 = smul.addr %s245, 24
        %s249 = sadd.s32 %s247, %s248
        %s250 = smul.addr %s249, 8
        %s251 = scalar_lea.vmem %s0, %s250
        %s252 = smul.u32 8, %s24
        %v253 = vld [vmem:[%s251] sm:$0xff]
        %v254 = vld [vmem:[%s251 + $0x8] sm:$0xff]
        %v255 = vld [vmem:[%s251 + $0x10] sm:$0xff]
        %v256 = vld [vmem:[%s251 + $0x18] sm:$0xff]
        %v257 = vld [vmem:[%s251 + $0x20] sm:$0xff]
        %v258 = vld [vmem:[%s251 + $0x28] sm:$0xff]
        %v259 = vld [vmem:[%s251 + $0x30] sm:$0xff]
        %v260 = vld [vmem:[%s251 + $0x38] sm:$0xff]
        %v261 = vld [vmem:[%s251 + $0x40] sm:$0xff]
        %v262 = vld [vmem:[%s251 + $0x48] sm:$0xff]
        %v263 = vld [vmem:[%s251 + $0x50] sm:$0xff]
        %v264 = vld [vmem:[%s251 + $0x58] sm:$0xff]
        %v265 = vld [vmem:[%s251 + $0x60] sm:$0xff]
        %v266 = vld [vmem:[%s251 + $0x68] sm:$0xff]
        %v267 = vld [vmem:[%s251 + $0x70] sm:$0xff]
        %v268 = vld [vmem:[%s251 + $0x78] sm:$0xff]
        %v269 = vld [vmem:[%s251 + $0x80] sm:$0xff]
        %v270 = vld [vmem:[%s251 + $0x88] sm:$0xff]
        %v271 = vld [vmem:[%s251 + $0x90] sm:$0xff]
        %v272 = vld [vmem:[%s251 + $0x98] sm:$0xff]
        %v273 = vld [vmem:[%s251 + $0xa0] sm:$0xff]
        %v274 = vld [vmem:[%s251 + $0xa8] sm:$0xff]
        %v275 = vld [vmem:[%s251 + $0xb0] sm:$0xff]
        %v276 = vld [vmem:[%s251 + $0xb8] sm:$0xff]
        %vm277 = vcmask 261120
        %v278 = vsel %vm277, %v253, 0.0
        %v279 = vsel %vm277, %v261, 0.0
        %v280 = vadd.f32 %v278, %v279
        %v281 = vsel %vm277, %v269, 0.0
        %v282 = vadd.f32 %v280, %v281
        %v283 = vsel %vm277, %v254, 0.0
        %v284 = vsel %vm277, %v262, 0.0
        %v285 = vadd.f32 %v283, %v284
        %v286 = vsel %vm277, %v270, 0.0
        %v287 = vadd.f32 %v285, %v286
        %v288 = vsel %vm277, %v255, 0.0
        %v289 = vsel %vm277, %v263, 0.0
        %v290 = vadd.f32 %v288, %v289
        %v291 = vsel %vm277, %v271, 0.0
        %v292 = vadd.f32 %v290, %v291
        %v293 = vsel %vm277, %v256, 0.0
        %v294 = vsel %vm277, %v264, 0.0
        %v295 = vadd.f32 %v293, %v294
        %v296 = vsel %vm277, %v272, 0.0
        %v297 = vadd.f32 %v295, %v296
        %v298 = vsel %vm277, %v257, 0.0
        %v299 = vsel %vm277, %v265, 0.0
        %v300 = vadd.f32 %v298, %v299
        %v301 = vsel %vm277, %v273, 0.0
        %v302 = vadd.f32 %v300, %v301
        %v303 = vsel %vm277, %v258, 0.0
        %v304 = vsel %vm277, %v266, 0.0
        %v305 = vadd.f32 %v303, %v304
        %v306 = vsel %vm277, %v274, 0.0
        %v307 = vadd.f32 %v305, %v306
        %v308 = vsel %vm277, %v259, 0.0
        %v309 = vsel %vm277, %v267, 0.0
        %v310 = vadd.f32 %v308, %v309
        %v311 = vsel %vm277, %v275, 0.0
        %v312 = vadd.f32 %v310, %v311
        %v313 = vsel %vm277, %v260, 0.0
        %v314 = vsel %vm277, %v268, 0.0
        %v315 = vadd.f32 %v313, %v314
        %v316 = vsel %vm277, %v276, 0.0
        %v317 = vadd.f32 %v315, %v316
        %v318 = vld [vmem:[%s1] sm:$0xff]
        %v319 = vld [vmem:[%s1 + $0x8] sm:$0xff]
        %v320 = vld [vmem:[%s1 + $0x10] sm:$0xff]
        %v321 = vld [vmem:[%s1 + $0x18] sm:$0xff]
        %v322 = vld [vmem:[%s1 + $0x20] sm:$0xff]
        %v323 = vld [vmem:[%s1 + $0x28] sm:$0xff]
        %v324 = vld [vmem:[%s1 + $0x30] sm:$0xff]
        %v325 = vld [vmem:[%s1 + $0x38] sm:$0xff]
        %v326 = vld [vmem:[%s2] sm:$0xff]
        %v327 = vld [vmem:[%s2 + $0x8] sm:$0xff]
        %v328 = vld [vmem:[%s2 + $0x10] sm:$0xff]
        %v329 = vld [vmem:[%s2 + $0x18] sm:$0xff]
        %v330 = vld [vmem:[%s2 + $0x20] sm:$0xff]
        %v331 = vld [vmem:[%s2 + $0x28] sm:$0xff]
        %v332 = vld [vmem:[%s2 + $0x30] sm:$0xff]
        %v333 = vld [vmem:[%s2 + $0x38] sm:$0xff]
        %335 = vset.pattern.permute.xlu0 0
        %336 = vperm.xlu0 %335, %v326
        %v337 = vpop.permute.xlu0 %336
        %340 = vset.pattern.permute.xlu0 0
        %341 = vperm.xlu0 %340, %v327
        %v342 = vpop.permute.xlu0 %341
        %345 = vset.pattern.permute.xlu0 0
        %346 = vperm.xlu0 %345, %v328
        %v347 = vpop.permute.xlu0 %346
        %350 = vset.pattern.permute.xlu0 0
        %351 = vperm.xlu0 %350, %v329
        %v352 = vpop.permute.xlu0 %351
        %355 = vset.pattern.permute.xlu0 0
        %356 = vperm.xlu0 %355, %v330
        %v357 = vpop.permute.xlu0 %356
        %360 = vset.pattern.permute.xlu0 0
        %361 = vperm.xlu0 %360, %v331
        %v362 = vpop.permute.xlu0 %361
        %365 = vset.pattern.permute.xlu0 0
        %366 = vperm.xlu0 %365, %v332
        %v367 = vpop.permute.xlu0 %366
        %370 = vset.pattern.permute.xlu0 0
        %371 = vperm.xlu0 %370, %v333
        %v372 = vpop.permute.xlu0 %371
        %v375 = vsel %vm277, %v318, 0
        %v378 = vsel %vm277, %v319, 0
        %v381 = vsel %vm277, %v320, 0
        %v384 = vsel %vm277, %v321, 0
        %v387 = vsel %vm277, %v322, 0
        %v390 = vsel %vm277, %v323, 0
        %v393 = vsel %vm277, %v324, 0
        %v396 = vsel %vm277, %v325, 0
        %v399 = vsel %vm277, %v282, 0
        %v402 = vsel %vm277, %v287, 0
        %v405 = vsel %vm277, %v292, 0
        %v408 = vsel %vm277, %v297, 0
        %v411 = vsel %vm277, %v302, 0
        %v414 = vsel %vm277, %v307, 0
        %v417 = vsel %vm277, %v312, 0
        %v420 = vsel %vm277, %v317, 0
        %422 = vmatprep.subr.mxu0 0.0
        %423 = vmatpush1.xpose.msra.mxu0 %v399
        %424 = vmatprep.subr.mxu0 0.0
        %425 = vmatpush1.xpose.msra.mxu0 %v402
        %426 = vmatprep.subr.mxu0 0.0
        %427 = vmatpush1.xpose.msra.mxu0 %v405
        %428 = vmatprep.subr.mxu0 0.0
        %429 = vmatpush1.xpose.msra.mxu0 %v408
        %430 = vmatprep.subr.mxu0 0.0
        %431 = vmatpush1.xpose.msra.mxu0 %v411
        %432 = vmatprep.subr.mxu0 0.0
        %433 = vmatpush1.xpose.msra.mxu0 %v414
        %434 = vmatprep.subr.mxu0 0.0
        %435 = vmatpush1.xpose.msra.mxu0 %v417
        %436 = vmatprep.subr.mxu0 0.0
        %437 = vmatpush1.xpose.msra.mxu0 %v420
        %438 = vmatprep.subr.mxu0 0.0
        %439 = vmatpush1.xpose.msra.mxu0 0.0
        %440 = vmatprep.subr.mxu0 0.0
        %441 = vmatpush1.xpose.msra.mxu0 0.0
        %442 = vmatprep.subr.mxu0 0.0
        %443 = vmatpush1.xpose.msra.mxu0 0.0
        %444 = vmatprep.subr.mxu0 0.0
        %445 = vmatpush1.xpose.msra.mxu0 0.0
        %446 = vmatprep.subr.mxu0 0.0
        %447 = vmatpush1.xpose.msra.mxu0 0.0
        %448 = vmatprep.subr.mxu0 0.0
        %449 = vmatpush1.xpose.msra.mxu0 0.0
        %450 = vmatprep.subr.mxu0 0.0
        %451 = vmatpush1.xpose.msra.mxu0 0.0
        %452 = vmatprep.subr.mxu0 0.0
        %453 = vmatpush1.xpose.msra.mxu0 0.0
        %454 = vmatprep.subr.mxu0 0.0
        %455 = vmatpush1.xpose.msra.mxu0 0.0
        %456 = vmatprep.subr.mxu0 0.0
        %457 = vmatpush1.xpose.msra.mxu0 0.0
        %458 = vmatprep.subr.mxu0 0.0
        %459 = vmatpush1.xpose.msra.mxu0 0.0
        %460 = vmatprep.subr.mxu0 0.0
        %461 = vmatpush1.xpose.msra.mxu0 0.0
        %462 = vmatprep.subr.mxu0 0.0
        %463 = vmatpush1.xpose.msra.mxu0 0.0
        %464 = vmatprep.subr.mxu0 0.0
        %465 = vmatpush1.xpose.msra.mxu0 0.0
        %466 = vmatprep.subr.mxu0 0.0
        %467 = vmatpush1.xpose.msra.mxu0 0.0
        %468 = vmatprep.subr.mxu0 0.0
        %469 = vmatpush1.xpose.msra.mxu0 0.0
        %470 = vmatprep.subr.mxu0 0.0
        %471 = vmatpush1.xpose.msra.mxu0 0.0
        %472 = vmatprep.subr.mxu0 0.0
        %473 = vmatpush1.xpose.msra.mxu0 0.0
        %474 = vmatprep.subr.mxu0 0.0
        %475 = vmatpush1.xpose.msra.mxu0 0.0
        %476 = vmatprep.subr.mxu0 0.0
        %477 = vmatpush1.xpose.msra.mxu0 0.0
        %478 = vmatprep.subr.mxu0 0.0
        %479 = vmatpush1.xpose.msra.mxu0 0.0
        %480 = vmatprep.subr.mxu0 0.0
        %481 = vmatpush1.xpose.msra.mxu0 0.0
        %482 = vmatprep.subr.mxu0 0.0
        %483 = vmatpush1.xpose.msra.mxu0 0.0
        %484 = vmatprep.subr.mxu0 0.0
        %485 = vmatpush1.xpose.msra.mxu0 0.0
        %486 = vmatprep.mubr.f32.mxu0 0.0
        %487 = vmatmul.mubr.f32.gmra.mrb[0].mxu0 %v375
        %v488 = vpop.f32.mrb[0].mxu0
        %v489 = vadd.f32 %v337, %v488
        %v490 = vpop.f32.mrb[0].mxu0
        %491 = vmatprep.mubr.f32.mxu0 0.0
        %492 = vmatmul.mubr.f32.gmra.mrb[0].mxu0 %v378
        %v493 = vpop.f32.mrb[0].mxu0
        %v494 = vadd.f32 %v342, %v493
        %v495 = vpop.f32.mrb[0].mxu0
        %496 = vmatprep.mubr.f32.mxu0 0.0
        %497 = vmatmul.mubr.f32.gmra.mrb[0].mxu0 %v381
        %v498 = vpop.f32.mrb[0].mxu0
        %v499 = vadd.f32 %v347, %v498
        %v500 = vpop.f32.mrb[0].mxu0
        %501 = vmatprep.mubr.f32.mxu0 0.0
        %502 = vmatmul.mubr.f32.gmra.mrb[0].mxu0 %v384
        %v503 = vpop.f32.mrb[0].mxu0
        %v504 = vadd.f32 %v352, %v503
        %v505 = vpop.f32.mrb[0].mxu0
        %506 = vmatprep.mubr.f32.mxu0 0.0
        %507 = vmatmul.mubr.f32.gmra.mrb[0].mxu0 %v387
        %v508 = vpop.f32.mrb[0].mxu0
        %v509 = vadd.f32 %v357, %v508
        %v510 = vpop.f32.mrb[0].mxu0
        %511 = vmatprep.mubr.f32.mxu0 0.0
        %512 = vmatmul.mubr.f32.gmra.mrb[0].mxu0 %v390
        %v513 = vpop.f32.mrb[0].mxu0
        %v514 = vadd.f32 %v362, %v513
        %v515 = vpop.f32.mrb[0].mxu0
        %516 = vmatprep.mubr.f32.mxu0 0.0
        %517 = vmatmul.mubr.f32.gmra.mrb[0].mxu0 %v393
        %v518 = vpop.f32.mrb[0].mxu0
        %v519 = vadd.f32 %v367, %v518
        %v520 = vpop.f32.mrb[0].mxu0
        %521 = vmatprep.mubr.f32.mxu0 0.0
        %522 = vmatmul.mubr.f32.gmra.mrb[0].mxu0 %v396
        %v523 = vpop.f32.mrb[0].mxu0
        %v524 = vadd.f32 %v372, %v523
        %v525 = vpop.f32.mrb[0].mxu0
        %526 = vdwg.mxu0
        %v527 = vmax.f32 %v489, 0.0
        %v528 = vmax.f32 %v494, 0.0
        %v529 = vmax.f32 %v499, 0.0
        %v530 = vmax.f32 %v504, 0.0
        %v531 = vmax.f32 %v509, 0.0
        %v532 = vmax.f32 %v514, 0.0
        %v533 = vmax.f32 %v519, 0.0
        %v534 = vmax.f32 %v524, 0.0
        %v535 = vand.u32 2147483647, %v489
        %v536 = vand.u32 2147483647, %v494
        %v537 = vand.u32 2147483647, %v499
        %v538 = vand.u32 2147483647, %v504
        %v539 = vand.u32 2147483647, %v509
        %v540 = vand.u32 2147483647, %v514
        %v541 = vand.u32 2147483647, %v519
        %v542 = vand.u32 2147483647, %v524
        %v543 = vsub.f32 0.0, %v535
        %v544 = vsub.f32 0.0, %v536
        %v545 = vsub.f32 0.0, %v537
        %v546 = vsub.f32 0.0, %v538
        %v547 = vsub.f32 0.0, %v539
        %v548 = vsub.f32 0.0, %v540
        %v549 = vsub.f32 0.0, %v541
        %v550 = vsub.f32 0.0, %v542
        %v551 = vmul.f32 %v543, 1.442695
        %v552 = vpow.pop %v551
        %v553 = vmul.f32 %v544, 1.442695
        %v554 = vpow.pop %v553
        %v555 = vmul.f32 %v545, 1.442695
        %v556 = vpow.pop %v555
        %v557 = vmul.f32 %v546, 1.442695
        %v558 = vpow.pop %v557
        %v559 = vmul.f32 %v547, 1.442695
        %v560 = vpow.pop %v559
        %v561 = vmul.f32 %v548, 1.442695
        %v562 = vpow.pop %v561
        %v563 = vmul.f32 %v549, 1.442695
        %v564 = vpow.pop %v563
        %v565 = vmul.f32 %v550, 1.442695
        %v566 = vpow.pop %v565
        %v567 = vadd.f32 %v552, 1.0
        %v568 = vlog2.pop %v567
        %v569 = vmul.f32 %v568, 0.6931472
        %v570 = vmul.f32 -0.5, %v552
        %v571 = vadd.f32 %v570, 1.0
        %v572 = vmul.f32 %v571, %v552
        %v573 = vand.u32 2147483647, %v552
        %vm574 = vcmp.lt.f32.partialorder %v573, 0.0004427343
        %v575 = vsel %vm574, %v572, %v569
        %v576 = vadd.f32 %v554, 1.0
        %v577 = vlog2.pop %v576
        %v578 = vmul.f32 %v577, 0.6931472
        %v579 = vmul.f32 -0.5, %v554
        %v580 = vadd.f32 %v579, 1.0
        %v581 = vmul.f32 %v580, %v554
        %v582 = vand.u32 2147483647, %v554
        %vm583 = vcmp.lt.f32.partialorder %v582, 0.0004427343
        %v584 = vsel %vm583, %v581, %v578
        %v585 = vadd.f32 %v556, 1.0
        %v586 = vlog2.pop %v585
        %v587 = vmul.f32 %v586, 0.6931472
        %v588 = vmul.f32 -0.5, %v556
        %v589 = vadd.f32 %v588, 1.0
        %v590 = vmul.f32 %v589, %v556
        %v591 = vand.u32 2147483647, %v556
        %vm592 = vcmp.lt.f32.partialorder %v591, 0.0004427343
        %v593 = vsel %vm592, %v590, %v587
        %v594 = vadd.f32 %v558, 1.0
        %v595 = vlog2.pop %v594
        %v596 = vmul.f32 %v595, 0.6931472
        %v597 = vmul.f32 -0.5, %v558
        %v598 = vadd.f32 %v597, 1.0
        %v599 = vmul.f32 %v598, %v558
        %v600 = vand.u32 2147483647, %v558
        %vm601 = vcmp.lt.f32.partialorder %v600, 0.0004427343
        %v602 = vsel %vm601, %v599, %v596
        %v603 = vadd.f32 %v560, 1.0
        %v604 = vlog2.pop %v603
        %v605 = vmul.f32 %v604, 0.6931472
        %v606 = vmul.f32 -0.5, %v560
        %v607 = vadd.f32 %v606, 1.0
        %v608 = vmul.f32 %v607, %v560
        %v609 = vand.u32 2147483647, %v560
        %vm610 = vcmp.lt.f32.partialorder %v609, 0.0004427343
        %v611 = vsel %vm610, %v608, %v605
        %v612 = vadd.f32 %v562, 1.0
        %v613 = vlog2.pop %v612
        %v614 = vmul.f32 %v613, 0.6931472
        %v615 = vmul.f32 -0.5, %v562
        %v616 = vadd.f32 %v615, 1.0
        %v617 = vmul.f32 %v616, %v562
        %v618 = vand.u32 2147483647, %v562
        %vm619 = vcmp.lt.f32.partialorder %v618, 0.0004427343
        %v620 = vsel %vm619, %v617, %v614
        %v621 = vadd.f32 %v564, 1.0
        %v622 = vlog2.pop %v621
        %v623 = vmul.f32 %v622, 0.6931472
        %v624 = vmul.f32 -0.5, %v564
        %v625 = vadd.f32 %v624, 1.0
        %v626 = vmul.f32 %v625, %v564
        %v627 = vand.u32 2147483647, %v564
        %vm628 = vcmp.lt.f32.partialorder %v627, 0.0004427343
        %v629 = vsel %vm628, %v626, %v623
        %v630 = vadd.f32 %v566, 1.0
        %v631 = vlog2.pop %v630
        %v632 = vmul.f32 %v631, 0.6931472
        %v633 = vmul.f32 -0.5, %v566
        %v634 = vadd.f32 %v633, 1.0
        %v635 = vmul.f32 %v634, %v566
        %v636 = vand.u32 2147483647, %v566
        %vm637 = vcmp.lt.f32.partialorder %v636, 0.0004427343
        %v638 = vsel %vm637, %v635, %v632
        %v639 = vadd.f32 %v527, %v575
        %v640 = vadd.f32 %v528, %v584
        %v641 = vadd.f32 %v529, %v593
        %v642 = vadd.f32 %v530, %v602
        %v643 = vadd.f32 %v531, %v611
        %v644 = vadd.f32 %v532, %v620
        %v645 = vadd.f32 %v533, %v629
        %v646 = vadd.f32 %v534, %v638
        %v647 = vld [vmem:[%s3] sm:$0xf]
        %v648 = vld [vmem:[%s4] sm:$0xf]
        %650 = vset.pattern.permute.xlu0 0
        %651 = vperm.xlu0 %650, %v648
        %v652 = vpop.permute.xlu0 %651
        %vm654 = vcmask 523264
        %v656 = vsel %vm654, %v647, 0
        %658 = vmatprep.subr.mxu0 0.0
        %659 = vmatpush1.msra.mxu0 %v639
        %660 = vmatprep.subr.mxu0 0.0
        %661 = vmatpush1.msra.mxu0 %v640
        %662 = vmatprep.subr.mxu0 0.0
        %663 = vmatpush1.msra.mxu0 %v641
        %664 = vmatprep.subr.mxu0 0.0
        %665 = vmatpush1.msra.mxu0 %v642
        %666 = vmatprep.subr.mxu0 0.0
        %667 = vmatpush1.msra.mxu0 %v643
        %668 = vmatprep.subr.mxu0 0.0
        %669 = vmatpush1.msra.mxu0 %v644
        %670 = vmatprep.subr.mxu0 0.0
        %671 = vmatpush1.msra.mxu0 %v645
        %672 = vmatprep.subr.mxu0 0.0
        %673 = vmatpush1.msra.mxu0 %v646
        %674 = vmatprep.subr.mxu0 0.0
        %675 = vmatpush1.msra.mxu0 0.0
        %676 = vmatprep.subr.mxu0 0.0
        %677 = vmatpush1.msra.mxu0 0.0
        %678 = vmatprep.subr.mxu0 0.0
        %679 = vmatpush1.msra.mxu0 0.0
        %680 = vmatprep.subr.mxu0 0.0
        %681 = vmatpush1.msra.mxu0 0.0
        %682 = vmatprep.subr.mxu0 0.0
        %683 = vmatpush1.msra.mxu0 0.0
        %684 = vmatprep.subr.mxu0 0.0
        %685 = vmatpush1.msra.mxu0 0.0
        %686 = vmatprep.subr.mxu0 0.0
        %687 = vmatpush1.msra.mxu0 0.0
        %688 = vmatprep.subr.mxu0 0.0
        %689 = vmatpush1.msra.mxu0 0.0
        %690 = vmatprep.subr.mxu0 0.0
        %691 = vmatpush1.msra.mxu0 0.0
        %692 = vmatprep.subr.mxu0 0.0
        %693 = vmatpush1.msra.mxu0 0.0
        %694 = vmatprep.subr.mxu0 0.0
        %695 = vmatpush1.msra.mxu0 0.0
        %696 = vmatprep.subr.mxu0 0.0
        %697 = vmatpush1.msra.mxu0 0.0
        %698 = vmatprep.subr.mxu0 0.0
        %699 = vmatpush1.msra.mxu0 0.0
        %700 = vmatprep.subr.mxu0 0.0
        %701 = vmatpush1.msra.mxu0 0.0
        %702 = vmatprep.subr.mxu0 0.0
        %703 = vmatpush1.msra.mxu0 0.0
        %704 = vmatprep.subr.mxu0 0.0
        %705 = vmatpush1.msra.mxu0 0.0
        %706 = vmatprep.subr.mxu0 0.0
        %707 = vmatpush1.msra.mxu0 0.0
        %708 = vmatprep.subr.mxu0 0.0
        %709 = vmatpush1.msra.mxu0 0.0
        %710 = vmatprep.subr.mxu0 0.0
        %711 = vmatpush1.msra.mxu0 0.0
        %712 = vmatprep.subr.mxu0 0.0
        %713 = vmatpush1.msra.mxu0 0.0
        %714 = vmatprep.subr.mxu0 0.0
        %715 = vmatpush1.msra.mxu0 0.0
        %716 = vmatprep.subr.mxu0 0.0
        %717 = vmatpush1.msra.mxu0 0.0
        %718 = vmatprep.subr.mxu0 0.0
        %719 = vmatpush1.msra.mxu0 0.0
        %720 = vmatprep.subr.mxu0 0.0
        %721 = vmatpush1.msra.mxu0 0.0
        %722 = vmatprep.mubr.f32.mxu0 0.0
        %723 = vmatmul.mubr.f32.gmra.mrb[0].mxu0 %v656
        %v724 = vpop.f32.mrb[0].mxu0
        %v725 = vadd.f32 %v652, %v724
        %v726 = vpop.f32.mrb[0].mxu0
        %727 = vdwg.mxu0
        %v728 = vxor.u32 %v725, 2147483648
        %v729 = vmul.f32 %v728, 1.442695
        %v730 = vpow.pop %v729
        %v731 = vadd.f32 %v730, 1.0
        %v732 = vrcp.pop %v731
        %v733 = vmul.f32 1.0, %v732
        %v734 = vmul.f32 %v733, 1.002
        %v735 = vsub.f32 %v734, 0.001
        %v736 = vlaneseq
        %v737 = vshrl.u32 %v736, 7
        %vm738 = vcmp.eq.s32.totalorder %v737, 0
        %v739 = vsel %vm738, %v725, %v735
        %vm740 = vcmask 519168
        %741 = vst.msk [vmem:[%s242] sm:$0xf] %vm740, %v739
        %s742 = sand.u32 %s153, 1
        %s743 = scalar_lea.sflag [#allocation3], %s742
        %s744 = sand.u32 %s153, 1
        %s745 = smul.addr %s744, 4
        %s746 = scalar_lea.vmem [#allocation2], %s745
        // Predicated region
        $region41: #{tpu_custom_call.1} parent=39 // pred_check
          %p747 = pneg %p163
        $region42: #{tpu_custom_call.1} parent=39 // pred_check_branch
          %749 = sbr.rel (%p747) target = $region44
        $region43: #{tpu_custom_call.1} parent=39 // pred_region
          %s751 = ssub.s32 64, 64
          %752 = vsyncadd %s743, %s751
          %s753 = sadd.s32 %s24, %s23
          %s754 = smul.addr %s753, 64
          %s755 = scalar_lea.hbm %s5, %s754
          %s757 = sshll.u32 %s746, 4
          %s758 = int_to_ptr.vmem [resolvable:$true] %s757
          %760 = dma.vmem_to_hbm [thread:$0]  %s758, 64, %s755, %s743
        $region44: #{tpu_custom_call.1} parent=39 // pred_fallthru
          _
      $region40: #{tpu_custom_call.1} parent=5 // pred_fallthru
        _
      %p761 = scmp.le.s32.totalorder 2, %s14
      // Predicated region
      $region45: #{tpu_custom_call.1} parent=5 // pred_check
        %p762 = pneg %p761
      $region46: #{tpu_custom_call.1} parent=5 // pred_check_branch
        %764 = sbr.rel (%p762) target = $region48
      $region47: #{tpu_custom_call.1} parent=5 // pred_region
        %s765 = ssub.s32 %s14, 2
        // Predicated region
        $region49: #{tpu_custom_call.1} parent=47 // pred_check
          %p766 = pneg %p169
        $region50: #{tpu_custom_call.1} parent=47 // pred_check_branch
          %768 = sbr.rel (%p766) target = $region52
        $region51: #{tpu_custom_call.1} parent=47 // pred_region
          %s769 = sand.u32 %s154, 1
          %s770 = scalar_lea.sflag [#allocation3], %s769
          %s771 = sand.u32 %s154, 1
          %s772 = smul.addr %s771, 4
          %s773 = scalar_lea.vmem [#allocation2], %s772
          %774 = dma.done %s770, 64
        $region52: #{tpu_custom_call.1} parent=47 // pred_fallthru
          _
      $region48: #{tpu_custom_call.1} parent=5 // pred_fallthru
        _
    $region6: #{tpu_custom_call.1} parent=1 // loop_footer
      %s18 = sadd.s32 1, %s14
    $region7: #{tpu_custom_call.1} parent=1 // loop_footer_branch
      %13 = sbr.rel target = $region3
    $region8: #{tpu_custom_call.1} parent=1 // loop_exit
      _
    %775 = vsyncpa [#allocation3], 1
    %s776 = scalar_lea.sflag [#allocation3], 1
    %777 = vsyncpa %s776, 1

</llo_original>
